<compile_context>
chip_gen: v5e
topology: v5e:2x2
jax: 0.10.0
libtpu: 0.0.40
codegen_flags: <defaults>
</compile_context>

<pallas_src>
import functools
import math

import jax
import jax.numpy as jnp
from jax import lax
from jax.experimental import pallas as pl
from jax.experimental.pallas import tpu as pltpu


# --------------------------------------------------------------------------- #
# Kernel 1: fused QKV projection   [Q|K|V] = x @ [Wq^T/sqrt(D) | Wk^T | Wv^T]
# --------------------------------------------------------------------------- #
def _qkv_proj_kernel(x_ref, wqkv_ref, q_ref, k_ref, v_ref, *, d_model):
    # x_ref    : (1, Ts, D) f32
    # wqkv_ref : (D, 3D)    matmul_dtype (softmax scale already folded into Q cols)
    # q/k/v_ref: (1, Ts, D) matmul_dtype
    x = x_ref[0].astype(wqkv_ref.dtype)            # the ONLY f32->matmul_dtype cast
    qkv = jnp.dot(x, wqkv_ref[...], preferred_element_type=jnp.float32)   # (Ts, 3D)
    # NOTE: for D a multiple of 128 these column splits are lane-aligned plain
    # stores; pad D to 128 for real workloads with odd head dims (review #13).
    q_ref[0] = qkv[:, :d_model].astype(q_ref.dtype)
    k_ref[0] = qkv[:, d_model:2 * d_model].astype(k_ref.dtype)
    v_ref[0] = qkv[:, 2 * d_model:].astype(v_ref.dtype)


# --------------------------------------------------------------------------- #
# Kernel 2: causal attention + residual, KV-blockwise with causal skipping
# --------------------------------------------------------------------------- #
def _attn_kernel(x_ref, q_ref, k_ref, v_ref, out_ref, attn_ref, acc_scr, *,
                 tile, seq_len, approx_recip):
    # x_ref   : (1, Tq, D) f32       residual input tile
    # q_ref   : (1, Tq, D) mm_dtype  pre-scaled queries
    # k_ref   : (1, S,  D) mm_dtype  keys   (resident per batch element)
    # v_ref   : (1, S,  D) mm_dtype  values (resident per batch element)
    # out_ref : (1, Tq, D) f32
    # attn_ref: (1, Tq, S) f32       also used as VMEM staging for scores / probs
    # acc_scr : (Tq, D)    f32       running P.V accumulator
    qi = pl.program_id(1)
    nvis = qi + 1                     # causally visible KV blocks (Tk == Tq)
    nkv = seq_len // tile
    row0 = qi * tile
    neg_big = jnp.float32(-1e30)      # finite stand-in for -inf; exp underflows to 0

    q = q_ref[0]                                                     # (Tq, D)
    rows = row0 + lax.broadcasted_iota(jnp.int32, (tile, tile), 0)

    # ---- pass 1: blockwise Q.K^T staged into attn_ref, running row max --------
    def score_block(j, m):
        col0 = pl.multiple_of(j * tile, tile)
        k_blk = k_ref[0, pl.ds(col0, tile), :]                       # (Tk, D)
        # NT contraction (both operands contract the feature dim) drives the MXU
        # directly — same form as the reference flash kernels, no per-tile
        # K transpose (review #11).
        s = lax.dot_general(q, k_blk, (((1,), (1,)), ((), ())),
                            preferred_element_type=jnp.float32)      # (Tq, Tk)
        cols = col0 + lax.broadcasted_iota(jnp.int32, (tile, tile), 1)
        s = jnp.where(cols > rows, neg_big, s)
        attn_ref[0, :, pl.ds(col0, tile)] = s
        return jnp.maximum(m, jnp.max(s, axis=-1, keepdims=True))

    m = lax.fori_loop(0, nvis, score_block,
                      jnp.full((tile, 1), neg_big, jnp.float32))

    # ---- pass 2: p = exp(s - m); accumulate denominator and P.V ----------------
    acc_scr[...] = jnp.zeros_like(acc_scr)

    def prob_block(j, den):
        col0 = pl.multiple_of(j * tile, tile)
        p = jnp.exp(attn_ref[0, :, pl.ds(col0, tile)] - m)           # (Tq, Tk)
        attn_ref[0, :, pl.ds(col0, tile)] = p
        v_blk = v_ref[0, pl.ds(col0, tile), :]                       # (Tk, D)
        acc_scr[...] += jnp.dot(p.astype(v_blk.dtype), v_blk,
                                preferred_element_type=jnp.float32)
        return den + jnp.sum(p, axis=-1, keepdims=True)

    denom = lax.fori_loop(0, nvis, prob_block,
                          jnp.zeros((tile, 1), jnp.float32))

    # ---- pass 3: normalize staged probs, zero the fully-masked tail -----------
    inv = pl.reciprocal(denom, approx=approx_recip)                  # (Tq, 1)

    def norm_block(j, carry):
        col0 = pl.multiple_of(j * tile, tile)
        attn_ref[0, :, pl.ds(col0, tile)] = attn_ref[0, :, pl.ds(col0, tile)] * inv
        return carry

    lax.fori_loop(0, nvis, norm_block, 0)

    def zero_block(j, carry):
        col0 = pl.multiple_of(j * tile, tile)
        attn_ref[0, :, pl.ds(col0, tile)] = jnp.zeros((tile, tile), jnp.float32)
        return carry

    lax.fori_loop(nvis, nkv, zero_block, 0)

    # ---- residual output -------------------------------------------------------
    out_ref[0] = (x_ref[0] + acc_scr[...] * inv).astype(out_ref.dtype)


# --------------------------------------------------------------------------- #
# VMEM sizing helpers
# --------------------------------------------------------------------------- #
def _attn_vmem_bytes(S, D, tile, mm_bytes):
    """Double-buffered VMEM footprint estimate for one attention grid step."""
    kv_in = 2 * 2 * S * D * mm_bytes               # K and V blocks, double-buffered
    qx_in = 2 * tile * D * (mm_bytes + 4)          # q tile + x tile
    outs = 2 * tile * D * 4 + 2 * tile * S * 4     # out tile + attn row block
    scratch = tile * D * 4                         # P.V accumulator
    return kv_in + qx_in + outs + scratch


def _vmem_capacity_bytes():
    try:
        return int(pltpu.get_tpu_info().vmem_capacity_bytes)
    except Exception:                 # query unavailable -> assume smallest (v7x)
        return 64 * 1024 * 1024


def _pick_q_tile(S, D, mm_bytes, budget):
    # Prefer MXU/lane-native multiples of 128 (v5e MXU tile, lane-dense stores).
    candidates = [t for t in (512, 256, 128) if S % t == 0]
    if not candidates:
        return S                      # tiny / odd sequences: a single query tile
    for t in candidates:
        if _attn_vmem_bytes(S, D, t, mm_bytes) <= budget:
            return t
    # TODO(synk): for very long S the resident (1,S,D) K/V blocks dominate VMEM;
    # switch K/V to memory_space=pl.ANY + manual double-buffered DMA per KV block.
    return candidates[-1]


# --------------------------------------------------------------------------- #
# Wrapper
# --------------------------------------------------------------------------- #
def single_head_self_attention(x, w_q, w_k, w_v, *, matmul_dtype=jnp.bfloat16,
                               q_tile=None, approx_recip=None):
    """
    x            : (B, S, D) float32
    w_q/w_k/w_v  : (D, D) float32, PyTorch nn.Linear layout (out_features, in_features)
    matmul_dtype : MXU operand dtype.  bf16 (default) runs the v6e/v7x MXU at full
                   rate with f32 accumulation; pass jnp.float32 for the exact path.
    approx_recip : EUP approximate reciprocal for the softmax denominator
                   (defaults to True on the bf16 path, False on the f32 path).
    Returns (out, attention): (B, S, D) and (B, S, S), matching the PyTorch module.
    """
    B, S, D = x.shape
    matmul_dtype = jnp.dtype(matmul_dtype)
    mm_bytes = matmul_dtype.itemsize
    if approx_recip is None:
        approx_recip = matmul_dtype != jnp.dtype(jnp.float32)

    # Fold the 1/sqrt(D) softmax scale into the Wq columns (one-time host-side
    # scale of a (D,D) block instead of a per-tile (Tq,S) VALU multiply).
    scale = 1.0 / math.sqrt(D)
    wqkv = jnp.concatenate([w_q.T * scale, w_k.T, w_v.T],
                           axis=1).astype(matmul_dtype)

    # ------------------- kernel 1: fused QKV projection ------------------- #
    proj_tile = 512 if S % 512 == 0 else S
    qkv_shape = jax.ShapeDtypeStruct((B, S, D), matmul_dtype)
    q, k, v = pl.pallas_call(
        functools.partial(_qkv_proj_kernel, d_model=D),
        out_shape=(qkv_shape, qkv_shape, qkv_shape),
        grid=(B, S // proj_tile),
        in_specs=[
            pl.BlockSpec((1, proj_tile, D), lambda b, si: (b, si, 0)),
            # Constant block index -> fetched once and kept resident.
            # TODO(synk): pipeline_mode=pl.Buffered(1) would drop the redundant
            # second (D,3D) weight buffer; left at default buffering because
            # single-buffered inputs are not accepted on all jax versions.
            pl.BlockSpec((D, 3 * D), lambda b, si: (0, 0)),
        ],
        out_specs=(
            pl.BlockSpec((1, proj_tile, D), lambda b, si: (b, si, 0)),
            pl.BlockSpec((1, proj_tile, D), lambda b, si: (b, si, 0)),
            pl.BlockSpec((1, proj_tile, D), lambda b, si: (b, si, 0)),
        ),
        compiler_params=pltpu.CompilerParams(
            dimension_semantics=("parallel", "parallel")),
    )(x, wqkv)

    # ---------------- kernel 2: causal attention + residual ---------------- #
    vmem_budget = min(_vmem_capacity_bytes(), 128 * 1024 * 1024) - 16 * 1024 * 1024
    tile = q_tile if q_tile is not None else _pick_q_tile(S, D, mm_bytes, vmem_budget)
    assert S % tile == 0, "seq_len must be divisible by the query tile (ragged unsupported)"
    nq = S // tile

    est = _attn_vmem_bytes(S, D, tile, mm_bytes)
    vmem_limit = int(min(max(est + (8 << 20), 32 << 20), vmem_budget))

    kernel = functools.partial(_attn_kernel, tile=tile, seq_len=S,
                               approx_recip=bool(approx_recip))

    out, attn = pl.pallas_call(
        kernel,
        out_shape=(
            jax.ShapeDtypeStruct((B, S, D), x.dtype),
            # Module semantics: f32 attention probabilities.  This (B,S,S) f32
            # writeback is the dominant HBM cost; keep S a multiple of 128 for
            # lane-dense stores, and emit bf16 here if the consumer allows it.
            jax.ShapeDtypeStruct((B, S, S), jnp.float32),
        ),
        grid=(B, nq),
        in_specs=[
            pl.BlockSpec((1, tile, D), lambda b, qi: (b, qi, 0)),   # x (residual)
            pl.BlockSpec((1, tile, D), lambda b, qi: (b, qi, 0)),   # q (pre-scaled)
            pl.BlockSpec((1, S, D), lambda b, qi: (b, 0, 0)),       # k, resident/batch
            pl.BlockSpec((1, S, D), lambda b, qi: (b, 0, 0)),       # v, resident/batch
        ],
        out_specs=(
            pl.BlockSpec((1, tile, D), lambda b, qi: (b, qi, 0)),
            pl.BlockSpec((1, tile, S), lambda b, qi: (b, qi, 0)),
        ),
        scratch_shapes=[pltpu.VMEM((tile, D), jnp.float32)],
        compiler_params=pltpu.CompilerParams(
            # No cross-step scratch carry -> both axes parallel (uses both v7x
            # TensorCores even when B == 1).
            dimension_semantics=("parallel", "parallel"),
            vmem_limit_bytes=vmem_limit,
        ),
    )(x, q, k, v)
    return out, attn


# --------------------------------------------------------------------------- #
# Pure-JAX reference mirroring the PyTorch forward
# --------------------------------------------------------------------------- #
def _reference(x, w_q, w_k, w_v):
    B, S, D = x.shape
    q = x @ w_q.T
    k = x @ w_k.T
    v = x @ w_v.T
    scores = jnp.einsum("bqd,bkd->bqk", q, k) / jnp.sqrt(jnp.float32(D))
    mask = jnp.triu(jnp.ones((S, S), dtype=bool), k=1)
    scores = jnp.where(mask[None], -jnp.inf, scores)
    attn = jax.nn.softmax(scores, axis=-1)
    out = x + jnp.einsum("bqk,bkd->bqd", attn, v)
    return out, attn


if __name__ == "__main__":
    # Small shapes consistent with the module's forward: B=2, seq=8, d_model=32.
    B, S, D = 2, 8, 32
    key = jax.random.PRNGKey(0)
    kx, kq, kk, kv = jax.random.split(key, 4)

    x = jax.random.normal(kx, (B, S, D), dtype=jnp.float32)
    bound = 1.0 / math.sqrt(D)
    w_q = jax.random.uniform(kq, (D, D), jnp.float32, -bound, bound)
    w_k = jax.random.uniform(kk, (D, D), jnp.float32, -bound, bound)
    w_v = jax.random.uniform(kv, (D, D), jnp.float32, -bound, bound)

    out_gold, attn_gold = _reference(x, w_q, w_k, w_v)

    # Exact path: f32 MXU operands, exact reciprocal, tight tolerances.
    out_f32, attn_f32 = single_head_self_attention(
        x, w_q, w_k, w_v, matmul_dtype=jnp.float32)
    jax.block_until_ready(out_f32)
    jax.block_until_ready(attn_f32)
    assert jnp.allclose(out_f32, out_gold, atol=1e-4, rtol=1e-4), "f32 out mismatch"
    assert jnp.allclose(attn_f32, attn_gold, atol=1e-5, rtol=1e-5), "f32 attn mismatch"

    # Default fast path: bf16 MXU operands (f32 accumulation / softmax), approx recip.
    out_bf, attn_bf = single_head_self_attention(x, w_q, w_k, w_v)
    jax.block_until_ready(out_bf)
    jax.block_until_ready(attn_bf)
    assert jnp.allclose(out_bf, out_gold, atol=5e-2, rtol=5e-2), "bf16 out mismatch"
    assert jnp.allclose(attn_bf, attn_gold, atol=5e-2, rtol=5e-2), "bf16 attn mismatch"

    print("KERNEL_OK")
</pallas_src>

<mosaic_0001>
module attributes {stable_mosaic.version = 11 : i64} {
  func.func @_qkv_proj_kernel(%arg0: i32, %arg1: i32, %arg2: memref<1x8x32xf32, #tpu.memory_space<vmem>>, %arg3: memref<32x96xf32, #tpu.memory_space<vmem>>, %arg4: memref<1x8x32xf32, #tpu.memory_space<vmem>>, %arg5: memref<1x8x32xf32, #tpu.memory_space<vmem>>, %arg6: memref<1x8x32xf32, #tpu.memory_space<vmem>>) attributes {dimension_semantics = [#tpu.dimension_semantics<parallel>, #tpu.dimension_semantics<parallel>], iteration_bounds = array<i64: 2, 1>, scalar_prefetch = 0 : i64, scratch_operands = 0 : i64, tpu.core_type = #tpu.core_type<tc>, window_params = [{transform_indices = @transform_0, window_bounds = array<i64: 1, 8, 32>}, {pipeline_mode = #tpu.pipeline_mode<synchronous>, transform_indices = @transform_1, window_bounds = array<i64: 32, 96>}, {transform_indices = @transform_2, window_bounds = array<i64: 1, 8, 32>}, {transform_indices = @transform_3, window_bounds = array<i64: 1, 8, 32>}, {transform_indices = @transform_4, window_bounds = array<i64: 1, 8, 32>}]} {
    %c0 = arith.constant 0 : index
    %c0_0 = arith.constant 0 : index
    %c0_1 = arith.constant 0 : index
    %0 = vector.load %arg2[%c0, %c0_0, %c0_1] : memref<1x8x32xf32, #tpu.memory_space<vmem>>, vector<1x8x32xf32>
    %1 = vector.shape_cast %0 : vector<1x8x32xf32> to vector<8x32xf32>
    %c0_2 = arith.constant 0 : index
    %c0_3 = arith.constant 0 : index
    %2 = vector.load %arg3[%c0_2, %c0_3] : memref<32x96xf32, #tpu.memory_space<vmem>>, vector<32x96xf32>
    %cst = arith.constant dense<0.000000e+00> : vector<8x96xf32>
    %3 = tpu.matmul %1, %2, %cst {dimension_numbers = #tpu.dot_dimension_numbers<[1], [0], [0], [1], [0, 0, 1, 1], [], []>} : vector<8x32xf32>, vector<32x96xf32>, vector<8x96xf32> -> vector<8x96xf32>
    %4 = vector.extract_strided_slice %3 {offsets = [0, 0], sizes = [8, 32], strides = [1, 1]} : vector<8x96xf32> to vector<8x32xf32>
    %c0_4 = arith.constant 0 : index
    %c0_5 = arith.constant 0 : index
    %c0_6 = arith.constant 0 : index
    %5 = vector.load %arg4[%c0_4, %c0_5, %c0_6] : memref<1x8x32xf32, #tpu.memory_space<vmem>>, vector<1x8x32xf32>
    %6 = vector.shape_cast %5 : vector<1x8x32xf32> to vector<8x32xf32>
    %7 = vector.shape_cast %4 : vector<8x32xf32> to vector<1x8x32xf32>
    tpu.vector_store %arg4[%c0_4, %c0_5, %c0_6], %7 {strides = array<i32>} : memref<1x8x32xf32, #tpu.memory_space<vmem>>, vector<1x8x32xf32>,
    %8 = vector.extract_strided_slice %3 {offsets = [0, 32], sizes = [8, 32], strides = [1, 1]} : vector<8x96xf32> to vector<8x32xf32>
    %c0_7 = arith.constant 0 : index
    %c0_8 = arith.constant 0 : index
    %c0_9 = arith.constant 0 : index
    %9 = vector.load %arg5[%c0_7, %c0_8, %c0_9] : memref<1x8x32xf32, #tpu.memory_space<vmem>>, vector<1x8x32xf32>
    %10 = vector.shape_cast %9 : vector<1x8x32xf32> to vector<8x32xf32>
    %11 = vector.shape_cast %8 : vector<8x32xf32> to vector<1x8x32xf32>
    tpu.vector_store %arg5[%c0_7, %c0_8, %c0_9], %11 {strides = array<i32>} : memref<1x8x32xf32, #tpu.memory_space<vmem>>, vector<1x8x32xf32>,
    %12 = vector.extract_strided_slice %3 {offsets = [0, 64], sizes = [8, 32], strides = [1, 1]} : vector<8x96xf32> to vector<8x32xf32>
    %c0_10 = arith.constant 0 : index
    %c0_11 = arith.constant 0 : index
    %c0_12 = arith.constant 0 : index
    %13 = vector.load %arg6[%c0_10, %c0_11, %c0_12] : memref<1x8x32xf32, #tpu.memory_space<vmem>>, vector<1x8x32xf32>
    %14 = vector.shape_cast %13 : vector<1x8x32xf32> to vector<8x32xf32>
    %15 = vector.shape_cast %12 : vector<8x32xf32> to vector<1x8x32xf32>
    tpu.vector_store %arg6[%c0_10, %c0_11, %c0_12], %15 {strides = array<i32>} : memref<1x8x32xf32, #tpu.memory_space<vmem>>, vector<1x8x32xf32>,
    return
  }
  func.func @transform_0(%arg0: i32, %arg1: i32) -> (i32, i32, i32) {
    %c0_i32 = arith.constant 0 : i32
    %c0_i32_0 = arith.constant 0 : i32
    return %arg0, %arg1, %c0_i32 : i32, i32, i32
  }
  func.func @transform_1(%arg0: i32, %arg1: i32) -> (i32, i32) {
    %c0_i32 = arith.constant 0 : i32
    %c0_i32_0 = arith.constant 0 : i32
    %c0_i32_1 = arith.constant 0 : i32
    return %c0_i32, %c0_i32_0 : i32, i32
  }
  func.func @transform_2(%arg0: i32, %arg1: i32) -> (i32, i32, i32) {
    %c0_i32 = arith.constant 0 : i32
    %c0_i32_0 = arith.constant 0 : i32
    return %arg0, %arg1, %c0_i32 : i32, i32, i32
  }
  func.func @transform_3(%arg0: i32, %arg1: i32) -> (i32, i32, i32) {
    %c0_i32 = arith.constant 0 : i32
    %c0_i32_0 = arith.constant 0 : i32
    return %arg0, %arg1, %c0_i32 : i32, i32, i32
  }
  func.func @transform_4(%arg0: i32, %arg1: i32) -> (i32, i32, i32) {
    %c0_i32 = arith.constant 0 : i32
    %c0_i32_0 = arith.constant 0 : i32
    return %arg0, %arg1, %c0_i32 : i32, i32, i32
  }
}

</mosaic_0001>

<llo_original>
// kernel: tpu_custom_call.1
$region0: #{tpu_custom_call.1}
  #allocation0 [shape = 'u32[]', space=smem, size = 0x4, offset = 0x4, fixed_abs, tag = 'smem constant byte address 0x4 - core index']
  #allocation1 [shape = 'u32[72,128]{1,0:T(1,128)}', space=vmem, size = 0x9000, scoped, tag = 'internal scratch']
  %s0 = inlined_call_operand.hbm [shape: f32[2,8,32], index: 0, kind: input, shape index: {}]
  %s1 = inlined_call_operand.hbm [shape: f32[32,96], index: 1, kind: input, shape index: {}]
  %s2 = inlined_call_operand.hbm [shape: f32[2,8,32], index: 2, kind: output, shape index: {0}]
  %s3 = inlined_call_operand.hbm [shape: f32[2,8,32], index: 3, kind: output, shape index: {1}]
  %s4 = inlined_call_operand.hbm [shape: f32[2,8,32], index: 4, kind: output, shape index: {2}]
  %5 = xla_tuple %s2, %s3, %s4
  %s6 = sld [smem:[#allocation0]]
  $region65: #{tpu_custom_call.1} parent=0
    _
  %s8 = ssub.s32 1, %s6
  %s9 = scalar_select 0, %s8, %s6
  $region1: #{tpu_custom_call.1} parent=0
    #allocation2 [shape = 'u8[8192]{0}', space=vmem, size = 0x2000, scoped, tag = 'input window, operand 0']
    #allocation3 [shape = 's32[2]{0}', space=sflag, size = 0x8, scoped, tag = 'scoped memory for tpu_custom_call.1']
    #allocation4 [shape = 's32[2]{0}', space=sflag, size = 0x8, scoped, tag = 'scoped memory for tpu_custom_call.1']
    #allocation5 [shape = 'u8[16384]{0}', space=vmem, size = 0x4000, scoped, tag = 'input window, operand 1, single buffered']
    #allocation6 [shape = 's32[1]{0}', space=sflag, size = 0x4, scoped, tag = 'scoped memory for tpu_custom_call.1']
    #allocation7 [shape = 'u8[8192]{0}', space=vmem, size = 0x2000, scoped, tag = 'output window, operand 0']
    #allocation8 [shape = 'u8[8192]{0}', space=vmem, size = 0x2000, scoped, tag = 'output window, operand 1']
    #allocation9 [shape = 's32[2]{0}', space=sflag, size = 0x8, scoped, tag = 'scoped memory for tpu_custom_call.1']
    #allocation10 [shape = 'u8[8192]{0}', space=vmem, size = 0x2000, scoped, tag = 'output window, operand 2']
    %10 = vsyncpa [#allocation3], 0
    %s11 = scalar_lea.sflag [#allocation3], 1
    %12 = vsyncpa %s11, 0
    %13 = vsyncpa [#allocation6], 0
    %14 = vsyncpa [#allocation4], 0
    %s15 = scalar_lea.sflag [#allocation4], 1
    %16 = vsyncpa %s15, 0
    %17 = vsyncpa [#allocation9], 0
    %s18 = scalar_lea.sflag [#allocation9], 1
    %19 = vsyncpa %s18, 0
    loop: start=0, step=1, limit=4
    $region2: #{tpu_custom_call.1} parent=1 // loop_pre_header
      _
    $region3: #{tpu_custom_call.1} parent=1 // loop_header
      %s21 = sphi 0, %s25
      %p22 = scmp.ge.s32.totalorder %s21, 4
      %s28 = sphi 0, %s40
      %s29 = sphi 0, %s36
      %s30 = sphi 0, %s28
      %s31 = sphi 0, %s29
      %s32 = sphi 0, %s30
      %s33 = sphi 0, %s31
      %s45 = sphi 0, %s47
      %s48 = sphi 0, %s45
      %s49 = sphi 0, %s48
      %s65 = sphi 0, %s49
      %s69 = sphi 0, %s69
      %s71 = sphi 0, %s69
      %s72 = sphi 0, %s71
      %s86 = sphi 0, %s72
      %s94 = sphi 0, %s96
      %s97 = sphi 0, %s94
      %s98 = sphi 0, %s97
      %s114 = sphi 0, %s98
      %s122 = sphi 0, %s124
      %s125 = sphi 0, %s122
      %s126 = sphi 0, %s125
      %s142 = sphi 0, %s126
      %s150 = sphi 0, %s152
      %s153 = sphi 0, %s150
      %s154 = sphi 0, %s153
      %s170 = sphi 0, %s154
    $region4: #{tpu_custom_call.1} parent=1 // loop_header_branch
      %24 = sbr.rel (%p22) target = $region8
    $region5: #{tpu_custom_call.1} parent=1 // loop_body
      %s26 = ssub.s32 %s21, 1
      %s27 = ssub.s32 %s21, 2
      %s34 = sadd.s32 1, %s29
      %p35 = scmp.ge.s32.totalorder %s34, 1
      %s36 = scalar_select %p35, 0, %s34
      %s37 = sadd.s32 1, %s28
      %s38 = scalar_select %p35, %s37, %s28
      %p39 = scmp.ge.s32.totalorder %s38, 2
      %s40 = scalar_select %p39, 0, %s38
      %s41 = ssub.s32 %s28, %s40
      %s42 = ssub.s32 %s29, %s36
      %s43 = sor.u32 %s41, %s42
      %p44 = scmp.eq.s32.totalorder %s43, 0
      %s46 = sadd.s32 %s45, 1
      %s47 = scalar_select %p44, %s45, %s46
      %p50 = pneg %p44
      %p51 = scmp.eq.s32.totalorder %s21, 1
      %p52 = por %p50, %p51
      %p53 = scmp.ne.s32.totalorder %s45, %s48
      %p54 = scmp.eq.s32.totalorder %s21, 0
      %p55 = por %p53, %p54
      %p56 = scmp.ne.s32.totalorder %s45, %s48
      %p57 = scmp.eq.s32.totalorder %s26, 1
      %p58 = por %p56, %p57
      %p59 = scmp.ne.s32.totalorder %s48, %s49
      %p60 = scmp.eq.s32.totalorder %s26, 0
      %p61 = por %p59, %p60
      %p62 = scmp.ne.s32.totalorder %s48, %s49
      %p63 = scmp.eq.s32.totalorder %s27, 1
      %p64 = por %p62, %p63
      %p66 = scmp.ne.s32.totalorder %s49, %s65
      %p67 = scmp.eq.s32.totalorder %s27, 0
      %p68 = por %p66, %p67
      %s70 = sadd.s32 %s69, 1
      %p73 = scmp.eq.s32.totalorder %s21, 1
      %p74 = scmp.ne.s32.totalorder %s69, %s71
      %p75 = scmp.eq.s32.totalorder %s21, 0
      %p76 = por %p74, %p75
      %p77 = scmp.ne.s32.totalorder %s69, %s71
      %p78 = scmp.eq.s32.totalorder %s26, 1
      %p79 = por %p77, %p78
      %p80 = scmp.ne.s32.totalorder %s71, %s72
      %p81 = scmp.eq.s32.totalorder %s26, 0
      %p82 = por %p80, %p81
      %p83 = scmp.ne.s32.totalorder %s71, %s72
      %p84 = scmp.eq.s32.totalorder %s27, 1
      %p85 = por %p83, %p84
      %p87 = scmp.ne.s32.totalorder %s72, %s86
      %p88 = scmp.eq.s32.totalorder %s27, 0
      %p89 = por %p87, %p88
      %s90 = ssub.s32 %s28, %s40
      %s91 = ssub.s32 %s29, %s36
      %s92 = sor.u32 %s90, %s91
      %p93 = scmp.eq.s32.totalorder %s92, 0
      %s95 = sadd.s32 %s94, 1
      %s96 = scalar_select %p93, %s94, %s95
      %p99 = pneg %p93
      %p100 = scmp.eq.s32.totalorder %s21, 1
      %p101 = por %p99, %p100
      %p102 = scmp.ne.s32.totalorder %s94, %s97
      %p103 = scmp.eq.s32.totalorder %s21, 0
      %p104 = por %p102, %p103
      %p105 = scmp.ne.s32.totalorder %s94, %s97
      %p106 = scmp.eq.s32.totalorder %s26, 1
      %p107 = por %p105, %p106
      %p108 = scmp.ne.s32.totalorder %s97, %s98
      %p109 = scmp.eq.s32.totalorder %s26, 0
      %p110 = por %p108, %p109
      %p111 = scmp.ne.s32.totalorder %s97, %s98
      %p112 = scmp.eq.s32.totalorder %s27, 1
      %p113 = por %p111, %p112
      %p115 = scmp.ne.s32.totalorder %s98, %s114
      %p116 = scmp.eq.s32.totalorder %s27, 0
      %p117 = por %p115, %p116
      %s118 = ssub.s32 %s28, %s40
      %s119 = ssub.s32 %s29, %s36
      %s120 = sor.u32 %s118, %s119
      %p121 = scmp.eq.s32.totalorder %s120, 0
      %s123 = sadd.s32 %s122, 1
      %s124 = scalar_select %p121, %s122, %s123
      %p127 = pneg %p121
      %p128 = scmp.eq.s32.totalorder %s21, 1
      %p129 = por %p127, %p128
      %p130 = scmp.ne.s32.totalorder %s122, %s125
      %p131 = scmp.eq.s32.totalorder %s21, 0
      %p132 = por %p130, %p131
      %p133 = scmp.ne.s32.totalorder %s122, %s125
      %p134 = scmp.eq.s32.totalorder %s26, 1
      %p135 = por %p133, %p134
      %p136 = scmp.ne.s32.totalorder %s125, %s126
      %p137 = scmp.eq.s32.totalorder %s26, 0
      %p138 = por %p136, %p137
      %p139 = scmp.ne.s32.totalorder %s125, %s126
      %p140 = scmp.eq.s32.totalorder %s27, 1
      %p141 = por %p139, %p140
      %p143 = scmp.ne.s32.totalorder %s126, %s142
      %p144 = scmp.eq.s32.totalorder %s27, 0
      %p145 = por %p143, %p144
      %s146 = ssub.s32 %s28, %s40
      %s147 = ssub.s32 %s29, %s36
      %s148 = sor.u32 %s146, %s147
      %p149 = scmp.eq.s32.totalorder %s148, 0
      %s151 = sadd.s32 %s150, 1
      %s152 = scalar_select %p149, %s150, %s151
      %p155 = pneg %p149
      %p156 = scmp.eq.s32.totalorder %s21, 1
      %p157 = por %p155, %p156
      %p158 = scmp.ne.s32.totalorder %s150, %s153
      %p159 = scmp.eq.s32.totalorder %s21, 0
      %p160 = por %p158, %p159
      %p161 = scmp.ne.s32.totalorder %s150, %s153
      %p162 = scmp.eq.s32.totalorder %s26, 1
      %p163 = por %p161, %p162
      %p164 = scmp.ne.s32.totalorder %s153, %s154
      %p165 = scmp.eq.s32.totalorder %s26, 0
      %p166 = por %p164, %p165
      %p167 = scmp.ne.s32.totalorder %s153, %s154
      %p168 = scmp.eq.s32.totalorder %s27, 1
      %p169 = por %p167, %p168
      %p171 = scmp.ne.s32.totalorder %s154, %s170
      %p172 = scmp.eq.s32.totalorder %s27, 0
      %p173 = por %p171, %p172
      %p174 = scmp.le.s32.totalorder 1, %s21
      %p175 = scmp.lt.s32.totalorder %s21, 3
      %p176 = pnand %p174, %p175
      %p177 = pneg %p176
      // Predicated region
      $region9: #{tpu_custom_call.1} parent=5 // pred_check
        _
      $region10: #{tpu_custom_call.1} parent=5 // pred_check_branch
        %179 = sbr.rel (%p176) target = $region12
      $region11: #{tpu_custom_call.1} parent=5 // pred_region
        %s180 = ssub.s32 %s21, 1
        // Predicated region
        $region13: #{tpu_custom_call.1} parent=11 // pred_check
          %p181 = pneg %p82
        $region14: #{tpu_custom_call.1} parent=11 // pred_check_branch
          %183 = sbr.rel (%p181) target = $region16
        $region15: #{tpu_custom_call.1} parent=11 // pred_region
          %185 = vsyncadd [#allocation6], 0
          %s186 = sshll.u32 %s1, 4
          %s187 = int_to_ptr.hbm [resolvable:$true] %s186
          %s188 = sshll.u32 [#allocation5], 4
          %s189 = int_to_ptr.vmem [resolvable:$true] %s188
          %194 = dma.hbm_to_vmem [thread:$0]  %s187, 512, %s189, [#allocation6], 128, 128, 8
        $region16: #{tpu_custom_call.1} parent=11 // pred_fallthru
          _
      $region12: #{tpu_custom_call.1} parent=5 // pred_fallthru
        _
      %p195 = scmp.lt.s32.totalorder %s21, 2
      // Predicated region
      $region17: #{tpu_custom_call.1} parent=5 // pred_check
        %p196 = pneg %p195
      $region18: #{tpu_custom_call.1} parent=5 // pred_check_branch
        %198 = sbr.rel (%p196) target = $region20
      $region19: #{tpu_custom_call.1} parent=5 // pred_region
        // Predicated region
        $region21: #{tpu_custom_call.1} parent=19 // pred_check
          %p199 = pneg %p55
        $region22: #{tpu_custom_call.1} parent=19 // pred_check_branch
          %201 = sbr.rel (%p199) target = $region24
        $region23: #{tpu_custom_call.1} parent=19 // pred_region
          %s202 = sand.u32 %s45, 1
          %s203 = scalar_lea.sflag [#allocation3], %s202
          %s204 = sand.u32 %s45, 1
          %s205 = smul.addr %s204, 8
          %s206 = scalar_lea.vmem [#allocation2], %s205
          %208 = vsyncadd %s203, 0
          %s209 = sadd.s32 %s29, %s28
          %s210 = smul.addr %s209, 8
          %s211 = scalar_lea.hbm %s0, %s210
          %s213 = sshll.u32 %s211, 4
          %s214 = int_to_ptr.hbm [resolvable:$true] %s213
          %s215 = sshll.u32 %s206, 4
          %s216 = int_to_ptr.vmem [resolvable:$true] %s215
          %218 = dma.hbm_to_vmem [thread:$0]  %s214, 128, %s216, %s203
        $region24: #{tpu_custom_call.1} parent=19 // pred_fallthru
          _
      $region20: #{tpu_custom_call.1} parent=5 // pred_fallthru
        _
      %p219 = scmp.le.s32.totalorder 1, %s21
      %p220 = scmp.lt.s32.totalorder %s21, 3
      %p221 = pnand %p219, %p220
      %p222 = pneg %p221
      // Predicated region
      $region25: #{tpu_custom_call.1} parent=5 // pred_check
        _
      $region26: #{tpu_custom_call.1} parent=5 // pred_check_branch
        %224 = sbr.rel (%p221) target = $region28
      $region27: #{tpu_custom_call.1} parent=5 // pred_region
        %s225 = ssub.s32 %s21, 1
        %s226 = sand.u32 %s48, 1
        %s227 = scalar_lea.sflag [#allocation3], %s226
        %s228 = sand.u32 %s48, 1
        %s229 = smul.addr %s228, 8
        %s230 = scalar_lea.vmem [#allocation2], %s229
        // Predicated region
        $region29: #{tpu_custom_call.1} parent=27 // pred_check
          %p231 = pneg %p61
        $region30: #{tpu_custom_call.1} parent=27 // pred_check_branch
          %233 = sbr.rel (%p231) target = $region32
        $region31: #{tpu_custom_call.1} parent=27 // pred_region
          %235 = dma.done %s227, 128
        $region32: #{tpu_custom_call.1} parent=27 // pred_fallthru
          _
        // Predicated region
        $region33: #{tpu_custom_call.1} parent=27 // pred_check
          %p236 = pneg %p82
        $region34: #{tpu_custom_call.1} parent=27 // pred_check_branch
          %238 = sbr.rel (%p236) target = $region36
        $region35: #{tpu_custom_call.1} parent=27 // pred_region
          %240 = dma.done [#allocation6], 512
        $region36: #{tpu_custom_call.1} parent=27 // pred_fallthru
          _
        %s241 = sand.u32 %s48, 1
        %s242 = scalar_lea.sflag [#allocation3], %s241
        %s243 = sand.u32 %s48, 1
        %s244 = smul.addr %s243, 8
        %s245 = scalar_lea.vmem [#allocation2], %s244
        %p246 = pneg %p61
        %p247 = pneg %p58
        %p248 = pneg %p82
        %p249 = pneg %p79
        %p250 = pneg %p110
        %p251 = pneg %p107
        %s252 = sand.u32 %s97, 1
        %s253 = scalar_lea.sflag [#allocation4], %s252
        %s254 = sand.u32 %s97, 1
        %s255 = smul.addr %s254, 8
        %s256 = scalar_lea.vmem [#allocation7], %s255
        %p257 = pneg %p138
        %p258 = pneg %p135
        %s259 = sand.u32 %s26, 1
        %s260 = scalar_lea.sflag [#allocation9], %s259
        %s261 = sand.u32 %s125, 1
        %s262 = smul.addr %s261, 8
        %s263 = scalar_lea.vmem [#allocation8], %s262
        %p264 = pneg %p166
        %p265 = pneg %p163
        %s266 = sand.u32 %s26, 1
        %s267 = scalar_lea.sflag [#allocation9], %s266
        %s268 = sand.u32 %s153, 1
        %s269 = smul.addr %s268, 8
        %s270 = scalar_lea.vmem [#allocation10], %s269
        %v271 = vld [vmem:[%s230] sm:$0xff]
        %v272 = vld [vmem:[#allocation5] sm:$0xff]
        %v273 = vld [vmem:[#allocation5 + $0x8] sm:$0xff]
        %v274 = vld [vmem:[#allocation5 + $0x10] sm:$0xff]
        %v275 = vld [vmem:[#allocation5 + $0x18] sm:$0xff]
        %vm276 = vcmask 261120
        %v278 = vsel %vm276, %v271, 0
        %280 = vmatpush.msra.mxu0 0.0
        %281 = vmatpush.msra.mxu0 0.0
        %282 = vmatpush.msra.mxu0 0.0
        %283 = vmatpush.msra.mxu0 0.0
        %284 = vmatpush.msra.mxu0 0.0
        %285 = vmatpush.msra.mxu0 0.0
        %286 = vmatpush.msra.mxu0 0.0
        %287 = vmatpush.msra.mxu0 0.0
        %288 = vmatpush.msra.mxu0 0.0
        %289 = vmatpush.msra.mxu0 0.0
        %290 = vmatpush.msra.mxu0 0.0
        %291 = vmatpush.msra.mxu0 0.0
        %292 = vmatpush.msra.mxu0 %v275
        %293 = vmatpush.msra.mxu0 %v274
        %294 = vmatpush.msra.mxu0 %v273
        %295 = vmatpush.msra.mxu0 %v272
        %296 = vmatmul.f32.gmra.mxu0 %v278
        %v297 = vpop.f32.mrf.mxu0
        %v298 = vadd.f32 0.0, %v297
        %299 = vdwg.mxu0
        %300 = vst.msk [vmem:[%s256] sm:$0xff] %vm276, %v298
        %302 = vrot.lane.b32.xlu0 %v298, 96
        %v303 = vpop.permute.xlu0 %302
        %305 = vst.msk [vmem:[%s263] sm:$0xff] %vm276, %v303
        %306 = vrot.lane.b32.xlu0 %v298, 64
        %v307 = vpop.permute.xlu0 %306
        %309 = vst.msk [vmem:[%s270] sm:$0xff] %vm276, %v307
        %s310 = sand.u32 %s97, 1
        %s311 = scalar_lea.sflag [#allocation4], %s310
        %s312 = sand.u32 %s97, 1
        %s313 = smul.addr %s312, 8
        %s314 = scalar_lea.vmem [#allocation7], %s313
        %s315 = sand.u32 %s26, 1
        %s316 = scalar_lea.sflag [#allocation9], %s315
        %s317 = sand.u32 %s125, 1
        %s318 = smul.addr %s317, 8
        %s319 = scalar_lea.vmem [#allocation8], %s318
        %s320 = sand.u32 %s26, 1
        %s321 = scalar_lea.sflag [#allocation9], %s320
        %s322 = sand.u32 %s153, 1
        %s323 = smul.addr %s322, 8
        %s324 = scalar_lea.vmem [#allocation10], %s323
        // Predicated region
        $region37: #{tpu_custom_call.1} parent=27 // pred_check
          %p325 = pneg %p107
        $region38: #{tpu_custom_call.1} parent=27 // pred_check_branch
          %327 = sbr.rel (%p325) target = $region40
        $region39: #{tpu_custom_call.1} parent=27 // pred_region
          %329 = vsyncadd %s311, 0
          %s330 = sadd.s32 %s31, %s30
          %s331 = smul.addr %s330, 8
          %s332 = scalar_lea.hbm %s2, %s331
          %s334 = sshll.u32 %s314, 4
          %s335 = int_to_ptr.vmem [resolvable:$true] %s334
          %s336 = sshll.u32 %s332, 4
          %s337 = int_to_ptr.hbm [resolvable:$true] %s336
          %339 = dma.vmem_to_hbm [thread:$0]  %s335, 128, %s337, %s311
        $region40: #{tpu_custom_call.1} parent=27 // pred_fallthru
          _
        // Predicated region
        $region41: #{tpu_custom_call.1} parent=27 // pred_check
          %p340 = pneg %p135
        $region42: #{tpu_custom_call.1} parent=27 // pred_check_branch
          %342 = sbr.rel (%p340) target = $region44
        $region43: #{tpu_custom_call.1} parent=27 // pred_region
          %344 = vsyncadd %s316, 0
          %s345 = sadd.s32 %s31, %s30
          %s346 = smul.addr %s345, 8
          %s347 = scalar_lea.hbm %s3, %s346
          %s349 = sshll.u32 %s319, 4
          %s350 = int_to_ptr.vmem [resolvable:$true] %s349
          %s351 = sshll.u32 %s347, 4
          %s352 = int_to_ptr.hbm [resolvable:$true] %s351
          %354 = dma.vmem_to_hbm [thread:$0]  %s350, 128, %s352, %s316
        $region44: #{tpu_custom_call.1} parent=27 // pred_fallthru
          _
        // Predicated region
        $region45: #{tpu_custom_call.1} parent=27 // pred_check
          %p355 = pneg %p163
        $region46: #{tpu_custom_call.1} parent=27 // pred_check_branch
          %357 = sbr.rel (%p355) target = $region48
        $region47: #{tpu_custom_call.1} parent=27 // pred_region
          %359 = vsyncadd %s321, 0
          %s360 = sadd.s32 %s31, %s30
          %s361 = smul.addr %s360, 8
          %s362 = scalar_lea.hbm %s4, %s361
          %s364 = sshll.u32 %s324, 4
          %s365 = int_to_ptr.vmem [resolvable:$true] %s364
          %s366 = sshll.u32 %s362, 4
          %s367 = int_to_ptr.hbm [resolvable:$true] %s366
          %369 = dma.vmem_to_hbm [thread:$0]  %s365, 128, %s367, %s321
        $region48: #{tpu_custom_call.1} parent=27 // pred_fallthru
          _
      $region28: #{tpu_custom_call.1} parent=5 // pred_fallthru
        _
      %p370 = scmp.le.s32.totalorder 2, %s21
      // Predicated region
      $region49: #{tpu_custom_call.1} parent=5 // pred_check
        %p371 = pneg %p370
      $region50: #{tpu_custom_call.1} parent=5 // pred_check_branch
        %373 = sbr.rel (%p371) target = $region52
      $region51: #{tpu_custom_call.1} parent=5 // pred_region
        %s374 = ssub.s32 %s21, 2
        // Predicated region
        $region53: #{tpu_custom_call.1} parent=51 // pred_check
          %p375 = pneg %p113
        $region54: #{tpu_custom_call.1} parent=51 // pred_check_branch
          %377 = sbr.rel (%p375) target = $region56
        $region55: #{tpu_custom_call.1} parent=51 // pred_region
          %s378 = sand.u32 %s98, 1
          %s379 = scalar_lea.sflag [#allocation4], %s378
          %s380 = sand.u32 %s98, 1
          %s381 = smul.addr %s380, 8
          %s382 = scalar_lea.vmem [#allocation7], %s381
          %384 = dma.done %s379, 128
        $region56: #{tpu_custom_call.1} parent=51 // pred_fallthru
          _
        // Predicated region
        $region57: #{tpu_custom_call.1} parent=51 // pred_check
          %p385 = pneg %p141
        $region58: #{tpu_custom_call.1} parent=51 // pred_check_branch
          %387 = sbr.rel (%p385) target = $region60
        $region59: #{tpu_custom_call.1} parent=51 // pred_region
          %s388 = sand.u32 %s27, 1
          %s389 = scalar_lea.sflag [#allocation9], %s388
          %s390 = sand.u32 %s126, 1
          %s391 = smul.addr %s390, 8
          %s392 = scalar_lea.vmem [#allocation8], %s391
          %394 = dma.done %s389, 128
        $region60: #{tpu_custom_call.1} parent=51 // pred_fallthru
          _
        // Predicated region
        $region61: #{tpu_custom_call.1} parent=51 // pred_check
          %p395 = pneg %p169
        $region62: #{tpu_custom_call.1} parent=51 // pred_check_branch
          %397 = sbr.rel (%p395) target = $region64
        $region63: #{tpu_custom_call.1} parent=51 // pred_region
          %s398 = sand.u32 %s27, 1
          %s399 = scalar_lea.sflag [#allocation9], %s398
          %s400 = sand.u32 %s154, 1
          %s401 = smul.addr %s400, 8
          %s402 = scalar_lea.vmem [#allocation10], %s401
          %404 = dma.done %s399, 128
        $region64: #{tpu_custom_call.1} parent=51 // pred_fallthru
          _
      $region52: #{tpu_custom_call.1} parent=5 // pred_fallthru
        _
    $region6: #{tpu_custom_call.1} parent=1 // loop_footer
      %s25 = sadd.s32 1, %s21
    $region7: #{tpu_custom_call.1} parent=1 // loop_footer_branch
      %20 = sbr.rel target = $region3
    $region8: #{tpu_custom_call.1} parent=1 // loop_exit
      _
    %405 = vsyncpa [#allocation3], 1
    %s406 = scalar_lea.sflag [#allocation3], 1
    %407 = vsyncpa %s406, 1
    %408 = vsyncpa [#allocation6], 1
    %409 = vsyncpa [#allocation4], 1
    %s410 = scalar_lea.sflag [#allocation4], 1
    %411 = vsyncpa %s410, 1
    %412 = vsyncpa [#allocation9], 1
    %s413 = scalar_lea.sflag [#allocation9], 1
    %414 = vsyncpa %s413, 1

</llo_original>
